<compile_context>
chip_gen: v7x
topology: tpu7x:2x2x1
jax: 0.10.0
libtpu: 0.0.40
codegen_flags: <defaults>
</compile_context>

<pallas_src>
from functools import partial

import jax
import jax.numpy as jnp
from jax import lax
from jax.experimental import pallas as pl
from jax.experimental.pallas import tpu as pltpu

NEG_SLOPE = 0.01   # F.leaky_relu default slope
ATT_SLOPE = 0.2    # GATConv attention leaky_relu slope
OUT_PAD = 128      # lane-dense output width; real out_ch columns sliced on host


def _leaky(x, slope):
    return jnp.where(x > 0, x, slope * x)


# ---------------- fused Pallas kernel ----------------

def _fused_kernel(a_ref, x_ref,
                  w1_ref, wr1_ref, b1_ref, br1_ref,
                  w2_ref, att_ref, b2_ref, s2_ref, wr2_ref, br2_ref,
                  w3_ref, wr3_ref, b3_ref, br3_ref,
                  w4_ref, b4_ref,
                  o_ref, *, heads, head_dim):
    A = a_ref[...]                                   # (N, N) bf16 normalized adjacency
    # A_norm has the same support as A_hat = A + I, so the GAT mask comes straight
    # from it (no separate N^2 mask operand / DMA).
    mask = A > 0
    N = A.shape[0]

    xb = x_ref[...].astype(jnp.bfloat16)             # (N, Cin)

    # ---- layer 1: GCN (+BN folded) + leaky_relu + residual Linear -----------
    y1 = jnp.dot(xb, w1_ref[...], preferred_element_type=jnp.float32)          # (N, hid)
    agg1 = jnp.dot(A, y1.astype(jnp.bfloat16),
                   preferred_element_type=jnp.float32) + b1_ref[...]
    res1 = jnp.dot(xb, wr1_ref[...], preferred_element_type=jnp.float32) + br1_ref[...]
    h1 = _leaky(agg1, NEG_SLOPE) + res1                                         # (N, hid) f32
    h1b = h1.astype(jnp.bfloat16)

    # ---- layer 2: GAT (heads, concat=False -> mean) (+BN folded) + residual -
    # fori_loop over heads: each head's (N, N) e/p/alpha temporaries are dead
    # before the next head starts -> bounded peak VMEM / vreg pressure.
    def head_body(h, gsum):
        w2h = w2_ref[h]                                                         # (hid, hd) bf16
        zh = jnp.dot(h1b, w2h, preferred_element_type=jnp.float32)              # (N, hd) f32
        zhb = zh.astype(jnp.bfloat16)
        sc = jnp.dot(zhb, att_ref[h], preferred_element_type=jnp.float32)       # (N, 2) src|dst
        s_src = jnp.transpose(sc)[0:1, :]                                       # (1, N)
        s_dst = sc[:, 1:2]                                                      # (N, 1)
        e = _leaky(s_dst + s_src, ATT_SLOPE)                                    # (N, N) f32
        e = jnp.where(mask, e, -1e30)
        e = e - jnp.max(e, axis=-1, keepdims=True)
        p = jnp.exp(e)
        alpha = p * pl.reciprocal(jnp.sum(p, axis=-1, keepdims=True), approx=True)
        ho = jnp.dot(alpha.astype(jnp.bfloat16), zhb,
                     preferred_element_type=jnp.float32)                        # (N, hd)
        return gsum + ho

    gsum = lax.fori_loop(0, heads, head_body, jnp.zeros((N, head_dim), jnp.float32))
    res2 = jnp.dot(h1b, wr2_ref[...], preferred_element_type=jnp.float32) + br2_ref[...]
    # s2_ref = bn_scale/heads ; b2_ref = bias*bn_scale + bn_shift
    h2 = _leaky(gsum * s2_ref[...] + b2_ref[...], NEG_SLOPE) + res2             # (N, hd) f32
    h2b = h2.astype(jnp.bfloat16)

    # ---- layer 3: GCN (+BN folded) + leaky_relu + residual Linear -----------
    y3 = jnp.dot(h2b, w3_ref[...], preferred_element_type=jnp.float32)          # (N, hid3)
    agg3 = jnp.dot(A, y3.astype(jnp.bfloat16),
                   preferred_element_type=jnp.float32) + b3_ref[...]
    res3 = jnp.dot(h2b, wr3_ref[...], preferred_element_type=jnp.float32) + br3_ref[...]
    h3 = _leaky(agg3, NEG_SLOPE) + res3                                         # (N, hid3) f32
    h3b = h3.astype(jnp.bfloat16)

    # ---- layer 4 + projection (folded on host: W4@Wp, zero-padded to 128) ----
    y4 = jnp.dot(h3b, w4_ref[...], preferred_element_type=jnp.float32)          # (N, 128)
    o_ref[...] = jnp.dot(A, y4.astype(jnp.bfloat16),
                         preferred_element_type=jnp.float32) + b4_ref[...]      # lane-dense store


# ---------------- wrapper ----------------

def gcn_gat_forward(x, A_norm_bf16, params):
    """Single fused pallas_call; every operand is a full-array VMEM block."""
    p = params
    N, cin = x.shape
    hid = p["w1f"].shape[1]
    H, hd = p["heads"], p["head_dim"]
    hid3 = p["w3f"].shape[1]
    outp = p["w4p"].shape[1]

    kernel = partial(_fused_kernel, heads=H, head_dim=hd)
    args = (A_norm_bf16, x,
            p["w1f"], p["wr1"], p["b1f"], p["br1"],
            p["w2h"], p["atth"], p["b2f"], p["s2h"], p["wr2"], p["br2"],
            p["w3f"], p["wr3"], p["b3f"], p["br3"],
            p["w4p"], p["b4p"])

    flops = int(
        4 * N * cin * hid                                  # x@W1, x@Wres1
        + 2 * N * N * hid                                  # A@y1
        + H * (2 * N * hid * hd + 4 * N * hd + 2 * N * N * hd)  # z_h, scores, alpha@z_h
        + 2 * N * hid * hd                                 # h1@Wres2
        + 4 * N * hd * hid3                                # h2@W3, h2@Wres3
        + 2 * N * N * hid3                                 # A@y3
        + 2 * N * hid3 * outp                              # h3@(W4@Wp)
        + 2 * N * N * outp)                                # A@y4
    transcendentals = int(H * (N * N + N))
    bytes_accessed = int(
        A_norm_bf16.size * 2 + x.size * 4 + N * outp * 4
        + sum(int(v.size) * (2 if v.dtype == jnp.bfloat16 else 4)
              for v in p.values() if isinstance(v, jax.Array)))

    out_pad = pl.pallas_call(
        kernel,
        out_shape=jax.ShapeDtypeStruct((N, outp), jnp.float32),
        in_specs=[pl.BlockSpec(memory_space=pltpu.MemorySpace.VMEM)] * len(args),
        out_specs=pl.BlockSpec(memory_space=pltpu.MemorySpace.VMEM),
        compiler_params=pltpu.CompilerParams(vmem_limit_bytes=32 * 1024 * 1024),
        cost_estimate=pl.CostEstimate(flops=flops, transcendentals=transcendentals,
                                      bytes_accessed=bytes_accessed),
    )(*args)
    return out_pad[:, :p["out_ch"]]


if __name__ == "__main__":
    key = jax.random.PRNGKey(0)
    N = 16                             # nodes
    in_ch, hid, out_ch = 8, 32, 4
    heads = 4
    hid2, hid3 = hid // 4, hid // 16   # 8, 2

    def nrm(k, shape, scale=0.1):
        return (scale * jax.random.normal(k, shape)).astype(jnp.float32)

    ks = iter(jax.random.split(key, 40))
    # conv1 / bn1 / res1
    w1 = nrm(next(ks), (in_ch, hid)); b1 = nrm(next(ks), (1, hid))
    g1 = 1.0 + nrm(next(ks), (1, hid)); be1 = nrm(next(ks), (1, hid))
    wr1 = nrm(next(ks), (in_ch, hid)); br1 = nrm(next(ks), (1, hid))
    # conv2 (GAT, heads=4, out=hid2, concat=False) / bn2 / res2
    w2 = nrm(next(ks), (hid, heads * hid2))
    asrc = nrm(next(ks), (heads, hid2)); adst = nrm(next(ks), (heads, hid2))
    b2 = nrm(next(ks), (1, hid2))
    g2 = 1.0 + nrm(next(ks), (1, hid2)); be2 = nrm(next(ks), (1, hid2))
    wr2 = nrm(next(ks), (hid, hid2)); br2 = nrm(next(ks), (1, hid2))
    # conv3 / bn3 / res3
    w3 = nrm(next(ks), (hid2, hid3)); b3 = nrm(next(ks), (1, hid3))
    g3 = 1.0 + nrm(next(ks), (1, hid3)); be3 = nrm(next(ks), (1, hid3))
    wr3 = nrm(next(ks), (hid2, hid3)); br3 = nrm(next(ks), (1, hid3))
    # conv4 / projection
    w4 = nrm(next(ks), (hid3, out_ch)); b4 = nrm(next(ks), (1, out_ch))
    wp = nrm(next(ks), (out_ch, out_ch)); bp = nrm(next(ks), (1, out_ch))

    x = nrm(next(ks), (N, in_ch), scale=1.0)

    # glue: undirected ring graph -> dense GCN-normalized adjacency (row = target)
    s = jnp.arange(N, dtype=jnp.int32)
    d = (s + 1) % N
    edge_index = jnp.stack([jnp.concatenate([s, d]), jnp.concatenate([d, s])], axis=0)
    A = jnp.zeros((N, N), jnp.float32).at[edge_index[1], edge_index[0]].set(1.0)
    eye = jnp.eye(N, dtype=jnp.float32)
    A_hat = A + eye
    dinv = 1.0 / jnp.sqrt(jnp.sum(A_hat, axis=1))
    A_norm = dinv[:, None] * A_hat * dinv[None, :]
    mask = jnp.minimum(A + eye, 1.0)            # only used by the pure-JAX reference

    # ---- host-side folding -------------------------------------------------
    eps = 1e-5
    s1 = g1 / jnp.sqrt(1.0 + eps)               # BN eval, running_mean=0, var=1
    s2 = g2 / jnp.sqrt(1.0 + eps)
    s3 = g3 / jnp.sqrt(1.0 + eps)

    bf16 = jnp.bfloat16
    # per-head GAT projection weights (H, hid, hd) and attention vectors (H, hd, 2)
    w2h = w2.reshape(hid, heads, hid2).transpose(1, 0, 2)
    atth = jnp.stack([asrc, adst], axis=-1)     # col0 = a_src, col1 = a_dst
    # conv4 + projection folded, zero-padded to a lane-dense 128-wide output
    w4p_full = jnp.zeros((hid3, OUT_PAD), jnp.float32).at[:, :out_ch].set(w4 @ wp)
    b4p_full = jnp.zeros((1, OUT_PAD), jnp.float32).at[:, :out_ch].set(b4 @ wp + bp)

    params = dict(
        heads=heads, head_dim=hid2, out_ch=out_ch,
        # layer 1: BN scale folded into W1
        w1f=(w1 * s1).astype(bf16), wr1=wr1.astype(bf16),
        b1f=b1 * s1 + be1, br1=br1,
        # layer 2 (GAT): BN folded into post-mean scale/bias
        w2h=w2h.astype(bf16), atth=atth.astype(bf16),
        b2f=b2 * s2 + be2, s2h=s2 / heads,
        wr2=wr2.astype(bf16), br2=br2,
        # layer 3
        w3f=(w3 * s3).astype(bf16), wr3=wr3.astype(bf16),
        b3f=b3 * s3 + be3, br3=br3,
        # layer 4 + projection (padded lane-dense)
        w4p=w4p_full.astype(bf16), b4p=b4p_full,
    )

    out = gcn_gat_forward(x, A_norm.astype(bf16), params)
    jax.block_until_ready(out)

    # ---- pure-JAX reference (f32, unfolded params, same eval semantics) -----
    def leaky(v, slope):
        return jnp.where(v > 0, v, slope * v)

    def ref_forward(xin):
        h1 = A_norm @ (xin @ w1) + b1
        h1 = h1 * s1 + be1
        h1 = leaky(h1, NEG_SLOPE) + (xin @ wr1 + br1)
        z = h1 @ w2
        acc = jnp.zeros((N, hid2), jnp.float32)
        for hh in range(heads):
            zh = z[:, hh * hid2:(hh + 1) * hid2]
            e = leaky((zh @ adst[hh])[:, None] + (zh @ asrc[hh])[None, :], ATT_SLOPE)
            e = jnp.where(mask > 0, e, -jnp.inf)
            acc = acc + jax.nn.softmax(e, axis=-1) @ zh
        h2 = (acc / heads + b2) * s2 + be2
        h2 = leaky(h2, NEG_SLOPE) + (h1 @ wr2 + br2)
        h3 = A_norm @ (h2 @ w3) + b3
        h3 = h3 * s3 + be3
        h3 = leaky(h3, NEG_SLOPE) + (h2 @ wr3 + br3)
        h4_ = A_norm @ (h3 @ w4) + b4
        return h4_ @ wp + bp

    ref = ref_forward(x)
    assert out.shape == (N, out_ch) and out.dtype == jnp.float32
    err = float(jnp.max(jnp.abs(out - ref)))
    # bf16 MXU inputs (f32 accumulation) + approx reciprocal -> small deviation
    assert err < 2e-2, f"max abs err {err}"
    print("KERNEL_OK")
</pallas_src>

<mosaic_0001>
module attributes {stable_mosaic.version = 11 : i64} {
  func.func @_fused_kernel(%arg0: memref<16x16xbf16, #tpu.memory_space<vmem>>, %arg1: memref<16x8xf32, #tpu.memory_space<vmem>>, %arg2: memref<8x32xbf16, #tpu.memory_space<vmem>>, %arg3: memref<8x32xbf16, #tpu.memory_space<vmem>>, %arg4: memref<1x32xf32, #tpu.memory_space<vmem>>, %arg5: memref<1x32xf32, #tpu.memory_space<vmem>>, %arg6: memref<4x32x8xbf16, #tpu.memory_space<vmem>>, %arg7: memref<4x8x2xbf16, #tpu.memory_space<vmem>>, %arg8: memref<1x8xf32, #tpu.memory_space<vmem>>, %arg9: memref<1x8xf32, #tpu.memory_space<vmem>>, %arg10: memref<32x8xbf16, #tpu.memory_space<vmem>>, %arg11: memref<1x8xf32, #tpu.memory_space<vmem>>, %arg12: memref<8x2xbf16, #tpu.memory_space<vmem>>, %arg13: memref<8x2xbf16, #tpu.memory_space<vmem>>, %arg14: memref<1x2xf32, #tpu.memory_space<vmem>>, %arg15: memref<1x2xf32, #tpu.memory_space<vmem>>, %arg16: memref<2x128xbf16, #tpu.memory_space<vmem>>, %arg17: memref<1x128xf32, #tpu.memory_space<vmem>>, %arg18: memref<16x128xf32, #tpu.memory_space<vmem>>) attributes {dimension_semantics = [], scalar_prefetch = 0 : i64, scratch_operands = 0 : i64, tpu.core_type = #tpu.core_type<tc>} {
    %c0 = arith.constant 0 : index
    %c0_0 = arith.constant 0 : index
    %0 = vector.load %arg0[%c0, %c0_0] : memref<16x16xbf16, #tpu.memory_space<vmem>>, vector<16x16xbf16>
    %cst = arith.constant 0.000000e+00 : bf16
    %1 = vector.broadcast %cst : bf16 to vector<16x16xbf16>
    %2 = arith.cmpf ogt, %0, %1 : vector<16x16xbf16>
    %c0_1 = arith.constant 0 : index
    %c0_2 = arith.constant 0 : index
    %3 = vector.load %arg1[%c0_1, %c0_2] : memref<16x8xf32, #tpu.memory_space<vmem>>, vector<16x8xf32>
    %4 = arith.truncf %3 : vector<16x8xf32> to vector<16x8xbf16>
    %c0_3 = arith.constant 0 : index
    %c0_4 = arith.constant 0 : index
    %5 = vector.load %arg2[%c0_3, %c0_4] : memref<8x32xbf16, #tpu.memory_space<vmem>>, vector<8x32xbf16>
    %cst_5 = arith.constant dense<0.000000e+00> : vector<16x32xf32>
    %6 = tpu.matmul %4, %5, %cst_5 {dimension_numbers = #tpu.dot_dimension_numbers<[1], [0], [0], [1], [0, 0, 1, 1], [], []>} : vector<16x8xbf16>, vector<8x32xbf16>, vector<16x32xf32> -> vector<16x32xf32>
    %7 = arith.truncf %6 : vector<16x32xf32> to vector<16x32xbf16>
    %cst_6 = arith.constant dense<0.000000e+00> : vector<16x32xf32>
    %8 = tpu.matmul %0, %7, %cst_6 {dimension_numbers = #tpu.dot_dimension_numbers<[1], [0], [0], [1], [0, 0, 1, 1], [], []>} : vector<16x16xbf16>, vector<16x32xbf16>, vector<16x32xf32> -> vector<16x32xf32>
    %c0_7 = arith.constant 0 : index
    %c0_8 = arith.constant 0 : index
    %9 = vector.load %arg4[%c0_7, %c0_8] : memref<1x32xf32, #tpu.memory_space<vmem>>, vector<1x32xf32>
    %10 = vector.broadcast %9 : vector<1x32xf32> to vector<16x32xf32>
    %11 = arith.addf %8, %10 : vector<16x32xf32>
    %c0_9 = arith.constant 0 : index
    %c0_10 = arith.constant 0 : index
    %12 = vector.load %arg3[%c0_9, %c0_10] : memref<8x32xbf16, #tpu.memory_space<vmem>>, vector<8x32xbf16>
    %cst_11 = arith.constant dense<0.000000e+00> : vector<16x32xf32>
    %13 = tpu.matmul %4, %12, %cst_11 {dimension_numbers = #tpu.dot_dimension_numbers<[1], [0], [0], [1], [0, 0, 1, 1], [], []>} : vector<16x8xbf16>, vector<8x32xbf16>, vector<16x32xf32> -> vector<16x32xf32>
    %c0_12 = arith.constant 0 : index
    %c0_13 = arith.constant 0 : index
    %14 = vector.load %arg5[%c0_12, %c0_13] : memref<1x32xf32, #tpu.memory_space<vmem>>, vector<1x32xf32>
    %15 = vector.broadcast %14 : vector<1x32xf32> to vector<16x32xf32>
    %16 = arith.addf %13, %15 : vector<16x32xf32>
    %cst_14 = arith.constant 0.000000e+00 : f32
    %17 = vector.broadcast %cst_14 : f32 to vector<16x32xf32>
    %18 = arith.cmpf ogt, %11, %17 : vector<16x32xf32>
    %cst_15 = arith.constant 0.00999999977 : f32
    %19 = vector.broadcast %cst_15 : f32 to vector<16x32xf32>
    %20 = arith.mulf %19, %11 : vector<16x32xf32>
    %21 = arith.select %18, %11, %20 : vector<16x32xi1>, vector<16x32xf32>
    %22 = arith.addf %21, %16 : vector<16x32xf32>
    %23 = arith.truncf %22 : vector<16x32xf32> to vector<16x32xbf16>
    %cst_16 = arith.constant 0.000000e+00 : f32
    %24 = vector.broadcast %cst_16 : f32 to vector<16x8xf32>
    %c0_i32 = arith.constant 0 : i32
    %c4_i32 = arith.constant 4 : i32
    %25 = arith.addi %c0_i32, %c4_i32 : i32
    %c1_i32 = arith.constant 1 : i32
    %26 = scf.for %arg19 = %c0_i32 to %25 step %c1_i32 iter_args(%arg20 = %24) -> (vector<16x8xf32>)  : i32 {
      %72 = arith.index_cast %arg19 : i32 to index
      %c0_50 = arith.constant 0 : index
      %c0_51 = arith.constant 0 : index
      %73 = vector.load %arg6[%72, %c0_50, %c0_51] : memref<4x32x8xbf16, #tpu.memory_space<vmem>>, vector<1x32x8xbf16>
      %74 = vector.shape_cast %73 : vector<1x32x8xbf16> to vector<32x8xbf16>
      %cst_52 = arith.constant dense<0.000000e+00> : vector<16x8xf32>
      %75 = tpu.matmul %23, %74, %cst_52 {dimension_numbers = #tpu.dot_dimension_numbers<[1], [0], [0], [1], [0, 0, 1, 1], [], []>} : vector<16x32xbf16>, vector<32x8xbf16>, vector<16x8xf32> -> vector<16x8xf32>
      %76 = arith.truncf %75 : vector<16x8xf32> to vector<16x8xbf16>
      %77 = arith.index_cast %arg19 : i32 to index
      %c0_53 = arith.constant 0 : index
      %c0_54 = arith.constant 0 : index
      %78 = vector.load %arg7[%77, %c0_53, %c0_54] : memref<4x8x2xbf16, #tpu.memory_space<vmem>>, vector<1x8x2xbf16>
      %79 = vector.shape_cast %78 : vector<1x8x2xbf16> to vector<8x2xbf16>
      %cst_55 = arith.constant dense<0.000000e+00> : vector<16x2xf32>
      %80 = tpu.matmul %76, %79, %cst_55 {dimension_numbers = #tpu.dot_dimension_numbers<[1], [0], [0], [1], [0, 0, 1, 1], [], []>} : vector<16x8xbf16>, vector<8x2xbf16>, vector<16x2xf32> -> vector<16x2xf32>
      %81 = tpu.transpose %80, [1, 0] : vector<16x2xf32> -> vector<2x16xf32>
      %82 = vector.extract_strided_slice %81 {offsets = [0, 0], sizes = [1, 16], strides = [1, 1]} : vector<2x16xf32> to vector<1x16xf32>
      %83 = vector.extract_strided_slice %80 {offsets = [0, 1], sizes = [16, 1], strides = [1, 1]} : vector<16x2xf32> to vector<16x1xf32>
      %84 = vector.broadcast %83 : vector<16x1xf32> to vector<16x16xf32>
      %85 = vector.broadcast %82 : vector<1x16xf32> to vector<16x16xf32>
      %86 = arith.addf %84, %85 : vector<16x16xf32>
      %cst_56 = arith.constant 0.000000e+00 : f32
      %87 = vector.broadcast %cst_56 : f32 to vector<16x16xf32>
      %88 = arith.cmpf ogt, %86, %87 : vector<16x16xf32>
      %cst_57 = arith.constant 2.000000e-01 : f32
      %89 = vector.broadcast %cst_57 : f32 to vector<16x16xf32>
      %90 = arith.mulf %89, %86 : vector<16x16xf32>
      %91 = arith.select %88, %86, %90 : vector<16x16xi1>, vector<16x16xf32>
      %cst_58 = arith.constant -1.000000e+30 : f32
      %92 = vector.broadcast %cst_58 : f32 to vector<16x16xf32>
      %93 = arith.select %2, %91, %92 : vector<16x16xi1>, vector<16x16xf32>
      %cst_59 = arith.constant dense<0xFF800000> : vector<16xf32>
      %94 = vector.multi_reduction <maximumf>, %93, %cst_59 [1] : vector<16x16xf32> to vector<16xf32>
      %95 = vector.shape_cast %94 : vector<16xf32> to vector<16x1xf32>
      %96 = vector.broadcast %95 : vector<16x1xf32> to vector<16x16xf32>
      %97 = arith.subf %93, %96 : vector<16x16xf32>
      %98 = math.exp %97 : vector<16x16xf32>
      %cst_60 = arith.constant dense<0.000000e+00> : vector<16xf32>
      %99 = vector.multi_reduction <add>, %98, %cst_60 [1] : vector<16x16xf32> to vector<16xf32>
      %100 = vector.shape_cast %99 : vector<16xf32> to vector<16x1xf32>
      %101 = tpu.reciprocal %100 {approx = true} : vector<16x1xf32> -> vector<16x1xf32>
      %102 = vector.broadcast %101 : vector<16x1xf32> to vector<16x16xf32>
      %103 = arith.mulf %98, %102 : vector<16x16xf32>
      %104 = arith.truncf %103 : vector<16x16xf32> to vector<16x16xbf16>
      %cst_61 = arith.constant dense<0.000000e+00> : vector<16x8xf32>
      %105 = tpu.matmul %104, %76, %cst_61 {dimension_numbers = #tpu.dot_dimension_numbers<[1], [0], [0], [1], [0, 0, 1, 1], [], []>} : vector<16x16xbf16>, vector<16x8xbf16>, vector<16x8xf32> -> vector<16x8xf32>
      %106 = arith.addf %arg20, %105 : vector<16x8xf32>
      scf.yield %106 : vector<16x8xf32>
    }
    %c4_i32_17 = arith.constant 4 : i32
    %c0_18 = arith.constant 0 : index
    %c0_19 = arith.constant 0 : index
    %27 = vector.load %arg10[%c0_18, %c0_19] : memref<32x8xbf16, #tpu.memory_space<vmem>>, vector<32x8xbf16>
    %cst_20 = arith.constant dense<0.000000e+00> : vector<16x8xf32>
    %28 = tpu.matmul %23, %27, %cst_20 {dimension_numbers = #tpu.dot_dimension_numbers<[1], [0], [0], [1], [0, 0, 1, 1], [], []>} : vector<16x32xbf16>, vector<32x8xbf16>, vector<16x8xf32> -> vector<16x8xf32>
    %c0_21 = arith.constant 0 : index
    %c0_22 = arith.constant 0 : index
    %29 = vector.load %arg11[%c0_21, %c0_22] : memref<1x8xf32, #tpu.memory_space<vmem>>, vector<1x8xf32>
    %30 = vector.broadcast %29 : vector<1x8xf32> to vector<16x8xf32>
    %31 = arith.addf %28, %30 : vector<16x8xf32>
    %c0_23 = arith.constant 0 : index
    %c0_24 = arith.constant 0 : index
    %32 = vector.load %arg9[%c0_23, %c0_24] : memref<1x8xf32, #tpu.memory_space<vmem>>, vector<1x8xf32>
    %33 = vector.broadcast %32 : vector<1x8xf32> to vector<16x8xf32>
    %34 = arith.mulf %26, %33 : vector<16x8xf32>
    %c0_25 = arith.constant 0 : index
    %c0_26 = arith.constant 0 : index
    %35 = vector.load %arg8[%c0_25, %c0_26] : memref<1x8xf32, #tpu.memory_space<vmem>>, vector<1x8xf32>
    %36 = vector.broadcast %35 : vector<1x8xf32> to vector<16x8xf32>
    %37 = arith.addf %34, %36 : vector<16x8xf32>
    %cst_27 = arith.constant 0.000000e+00 : f32
    %38 = vector.broadcast %cst_27 : f32 to vector<16x8xf32>
    %39 = arith.cmpf ogt, %37, %38 : vector<16x8xf32>
    %cst_28 = arith.constant 0.00999999977 : f32
    %40 = vector.broadcast %cst_28 : f32 to vector<16x8xf32>
    %41 = arith.mulf %40, %37 : vector<16x8xf32>
    %42 = arith.select %39, %37, %41 : vector<16x8xi1>, vector<16x8xf32>
    %43 = arith.addf %42, %31 : vector<16x8xf32>
    %44 = arith.truncf %43 : vector<16x8xf32> to vector<16x8xbf16>
    %c0_29 = arith.constant 0 : index
    %c0_30 = arith.constant 0 : index
    %45 = vector.load %arg12[%c0_29, %c0_30] : memref<8x2xbf16, #tpu.memory_space<vmem>>, vector<8x2xbf16>
    %cst_31 = arith.constant dense<0.000000e+00> : vector<16x2xf32>
    %46 = tpu.matmul %44, %45, %cst_31 {dimension_numbers = #tpu.dot_dimension_numbers<[1], [0], [0], [1], [0, 0, 1, 1], [], []>} : vector<16x8xbf16>, vector<8x2xbf16>, vector<16x2xf32> -> vector<16x2xf32>
    %47 = arith.truncf %46 : vector<16x2xf32> to vector<16x2xbf16>
    %cst_32 = arith.constant dense<0.000000e+00> : vector<16x2xf32>
    %48 = tpu.matmul %0, %47, %cst_32 {dimension_numbers = #tpu.dot_dimension_numbers<[1], [0], [0], [1], [0, 0, 1, 1], [], []>} : vector<16x16xbf16>, vector<16x2xbf16>, vector<16x2xf32> -> vector<16x2xf32>
    %c0_33 = arith.constant 0 : index
    %c0_34 = arith.constant 0 : index
    %49 = vector.load %arg14[%c0_33, %c0_34] : memref<1x2xf32, #tpu.memory_space<vmem>>, vector<1x2xf32>
    %50 = vector.broadcast %49 : vector<1x2xf32> to vector<16x2xf32>
    %51 = arith.addf %48, %50 : vector<16x2xf32>
    %c0_35 = arith.constant 0 : index
    %c0_36 = arith.constant 0 : index
    %52 = vector.load %arg13[%c0_35, %c0_36] : memref<8x2xbf16, #tpu.memory_space<vmem>>, vector<8x2xbf16>
    %cst_37 = arith.constant dense<0.000000e+00> : vector<16x2xf32>
    %53 = tpu.matmul %44, %52, %cst_37 {dimension_numbers = #tpu.dot_dimension_numbers<[1], [0], [0], [1], [0, 0, 1, 1], [], []>} : vector<16x8xbf16>, vector<8x2xbf16>, vector<16x2xf32> -> vector<16x2xf32>
    %c0_38 = arith.constant 0 : index
    %c0_39 = arith.constant 0 : index
    %54 = vector.load %arg15[%c0_38, %c0_39] : memref<1x2xf32, #tpu.memory_space<vmem>>, vector<1x2xf32>
    %55 = vector.broadcast %54 : vector<1x2xf32> to vector<16x2xf32>
    %56 = arith.addf %53, %55 : vector<16x2xf32>
    %cst_40 = arith.constant 0.000000e+00 : f32
    %57 = vector.broadcast %cst_40 : f32 to vector<16x2xf32>
    %58 = arith.cmpf ogt, %51, %57 : vector<16x2xf32>
    %cst_41 = arith.constant 0.00999999977 : f32
    %59 = vector.broadcast %cst_41 : f32 to vector<16x2xf32>
    %60 = arith.mulf %59, %51 : vector<16x2xf32>
    %61 = arith.select %58, %51, %60 : vector<16x2xi1>, vector<16x2xf32>
    %62 = arith.addf %61, %56 : vector<16x2xf32>
    %63 = arith.truncf %62 : vector<16x2xf32> to vector<16x2xbf16>
    %c0_42 = arith.constant 0 : index
    %c0_43 = arith.constant 0 : index
    %64 = vector.load %arg16[%c0_42, %c0_43] : memref<2x128xbf16, #tpu.memory_space<vmem>>, vector<2x128xbf16>
    %cst_44 = arith.constant dense<0.000000e+00> : vector<16x128xf32>
    %65 = tpu.matmul %63, %64, %cst_44 {dimension_numbers = #tpu.dot_dimension_numbers<[1], [0], [0], [1], [0, 0, 1, 1], [], []>} : vector<16x2xbf16>, vector<2x128xbf16>, vector<16x128xf32> -> vector<16x128xf32>
    %66 = arith.truncf %65 : vector<16x128xf32> to vector<16x128xbf16>
    %cst_45 = arith.constant dense<0.000000e+00> : vector<16x128xf32>
    %67 = tpu.matmul %0, %66, %cst_45 {dimension_numbers = #tpu.dot_dimension_numbers<[1], [0], [0], [1], [0, 0, 1, 1], [], []>} : vector<16x16xbf16>, vector<16x128xbf16>, vector<16x128xf32> -> vector<16x128xf32>
    %c0_46 = arith.constant 0 : index
    %c0_47 = arith.constant 0 : index
    %68 = vector.load %arg17[%c0_46, %c0_47] : memref<1x128xf32, #tpu.memory_space<vmem>>, vector<1x128xf32>
    %69 = vector.broadcast %68 : vector<1x128xf32> to vector<16x128xf32>
    %70 = arith.addf %67, %69 : vector<16x128xf32>
    %c0_48 = arith.constant 0 : index
    %c0_49 = arith.constant 0 : index
    %71 = vector.load %arg18[%c0_48, %c0_49] : memref<16x128xf32, #tpu.memory_space<vmem>>, vector<16x128xf32>
    tpu.vector_store %arg18[%c0_48, %c0_49], %70 {strides = array<i32>} : memref<16x128xf32, #tpu.memory_space<vmem>>, vector<16x128xf32>,
    return
  }
}

</mosaic_0001>

<llo_original>
// kernel: tpu_custom_call.1
$region0: #{tpu_custom_call.1}
  #allocation0 [shape = 'u32[]', space=smem, size = 0x4, offset = 0x4, fixed_abs, tag = 'smem constant byte address 0x4 - core index']
  #allocation1 [shape = 'u32[144,128]{1,0:T(1,128)}', space=vmem, size = 0x12000, scoped, tag = 'internal scratch']
  %s0 = inlined_call_operand.vmem [shape: bf16[16,16], index: 0, kind: input, shape index: {}]
  %s1 = inlined_call_operand.vmem [shape: f32[16,8], index: 1, kind: input, shape index: {}]
  %s2 = inlined_call_operand.vmem [shape: bf16[8,32], index: 2, kind: input, shape index: {}]
  %s3 = inlined_call_operand.vmem [shape: bf16[8,32], index: 3, kind: input, shape index: {}]
  %s4 = inlined_call_operand.vmem [shape: f32[1,32], index: 4, kind: input, shape index: {}]
  %s5 = inlined_call_operand.vmem [shape: f32[1,32], index: 5, kind: input, shape index: {}]
  %s6 = inlined_call_operand.vmem [shape: bf16[4,32,8], index: 6, kind: input, shape index: {}]
  %s7 = inlined_call_operand.vmem [shape: bf16[4,8,2], index: 7, kind: input, shape index: {}]
  %s8 = inlined_call_operand.vmem [shape: f32[1,8], index: 8, kind: input, shape index: {}]
  %s9 = inlined_call_operand.vmem [shape: f32[1,8], index: 9, kind: input, shape index: {}]
  %s10 = inlined_call_operand.vmem [shape: bf16[32,8], index: 10, kind: input, shape index: {}]
  %s11 = inlined_call_operand.vmem [shape: f32[1,8], index: 11, kind: input, shape index: {}]
  %s12 = inlined_call_operand.vmem [shape: bf16[8,2], index: 12, kind: input, shape index: {}]
  %s13 = inlined_call_operand.vmem [shape: bf16[8,2], index: 13, kind: input, shape index: {}]
  %s14 = inlined_call_operand.vmem [shape: f32[1,2], index: 14, kind: input, shape index: {}]
  %s15 = inlined_call_operand.vmem [shape: f32[1,2], index: 15, kind: input, shape index: {}]
  %s16 = inlined_call_operand.vmem [shape: bf16[2,128], index: 16, kind: input, shape index: {}]
  %s17 = inlined_call_operand.vmem [shape: f32[1,128], index: 17, kind: input, shape index: {}]
  %s18 = inlined_call_operand.hbm [shape: f32[16,128], index: 18, kind: output, shape index: {}]
  %s19 = sld [smem:[#allocation0]]
  $region89: #{tpu_custom_call.1} parent=0
    _
  %s21 = ssub.s32 1, %s19
  %s22 = scalar_select 0, %s21, %s19
  $region1: #{tpu_custom_call.1} parent=0
    #allocation2 [shape = 'u8[8192]{0}', space=vmem, size = 0x2000, scoped, tag = 'output window, operand 0, single buffered']
    #allocation3 [shape = 's32[1]{0}', space=sflag, size = 0x4, scoped, tag = 'scoped memory for tpu_custom_call.1']
    %23 = vsyncpa [#allocation3], 0
    // Predicated region
    $region2: #{tpu_custom_call.1} parent=1 // pred_check
      _
    $region3: #{tpu_custom_call.1} parent=1 // pred_check_branch
      %25 = sbr.rel (0) target = $region5
    $region4: #{tpu_custom_call.1} parent=1 // pred_region
      _
    $region5: #{tpu_custom_call.1} parent=1 // pred_fallthru
      _
    // Predicated region
    $region6: #{tpu_custom_call.1} parent=1 // pred_check
      _
    $region7: #{tpu_custom_call.1} parent=1 // pred_check_branch
      %27 = sbr.rel (0) target = $region9
    $region8: #{tpu_custom_call.1} parent=1 // pred_region
      _
    $region9: #{tpu_custom_call.1} parent=1 // pred_fallthru
      _
    // Predicated region
    $region10: #{tpu_custom_call.1} parent=1 // pred_check
      _
    $region11: #{tpu_custom_call.1} parent=1 // pred_check_branch
      %29 = sbr.rel (0) target = $region13
    $region12: #{tpu_custom_call.1} parent=1 // pred_region
      _
    $region13: #{tpu_custom_call.1} parent=1 // pred_fallthru
      _
    // Predicated region
    $region14: #{tpu_custom_call.1} parent=1 // pred_check
      _
    $region15: #{tpu_custom_call.1} parent=1 // pred_check_branch
      %31 = sbr.rel (0) target = $region17
    $region16: #{tpu_custom_call.1} parent=1 // pred_region
      _
    $region17: #{tpu_custom_call.1} parent=1 // pred_fallthru
      _
    // Predicated region
    $region18: #{tpu_custom_call.1} parent=1 // pred_check
      _
    $region19: #{tpu_custom_call.1} parent=1 // pred_check_branch
      %33 = sbr.rel (0) target = $region21
    $region20: #{tpu_custom_call.1} parent=1 // pred_region
      _
    $region21: #{tpu_custom_call.1} parent=1 // pred_fallthru
      _
    // Predicated region
    $region22: #{tpu_custom_call.1} parent=1 // pred_check
      _
    $region23: #{tpu_custom_call.1} parent=1 // pred_check_branch
      %35 = sbr.rel (0) target = $region25
    $region24: #{tpu_custom_call.1} parent=1 // pred_region
      _
    $region25: #{tpu_custom_call.1} parent=1 // pred_fallthru
      _
    // Predicated region
    $region26: #{tpu_custom_call.1} parent=1 // pred_check
      _
    $region27: #{tpu_custom_call.1} parent=1 // pred_check_branch
      %37 = sbr.rel (0) target = $region29
    $region28: #{tpu_custom_call.1} parent=1 // pred_region
      _
    $region29: #{tpu_custom_call.1} parent=1 // pred_fallthru
      _
    // Predicated region
    $region30: #{tpu_custom_call.1} parent=1 // pred_check
      _
    $region31: #{tpu_custom_call.1} parent=1 // pred_check_branch
      %39 = sbr.rel (0) target = $region33
    $region32: #{tpu_custom_call.1} parent=1 // pred_region
      _
    $region33: #{tpu_custom_call.1} parent=1 // pred_fallthru
      _
    // Predicated region
    $region34: #{tpu_custom_call.1} parent=1 // pred_check
      _
    $region35: #{tpu_custom_call.1} parent=1 // pred_check_branch
      %41 = sbr.rel (0) target = $region37
    $region36: #{tpu_custom_call.1} parent=1 // pred_region
      _
    $region37: #{tpu_custom_call.1} parent=1 // pred_fallthru
      _
    // Predicated region
    $region38: #{tpu_custom_call.1} parent=1 // pred_check
      _
    $region39: #{tpu_custom_call.1} parent=1 // pred_check_branch
      %43 = sbr.rel (0) target = $region41
    $region40: #{tpu_custom_call.1} parent=1 // pred_region
      _
    $region41: #{tpu_custom_call.1} parent=1 // pred_fallthru
      _
    // Predicated region
    $region42: #{tpu_custom_call.1} parent=1 // pred_check
      _
    $region43: #{tpu_custom_call.1} parent=1 // pred_check_branch
      %45 = sbr.rel (0) target = $region45
    $region44: #{tpu_custom_call.1} parent=1 // pred_region
      _
    $region45: #{tpu_custom_call.1} parent=1 // pred_fallthru
      _
    // Predicated region
    $region46: #{tpu_custom_call.1} parent=1 // pred_check
      _
    $region47: #{tpu_custom_call.1} parent=1 // pred_check_branch
      %47 = sbr.rel (0) target = $region49
    $region48: #{tpu_custom_call.1} parent=1 // pred_region
      _
    $region49: #{tpu_custom_call.1} parent=1 // pred_fallthru
      _
    // Predicated region
    $region50: #{tpu_custom_call.1} parent=1 // pred_check
      _
    $region51: #{tpu_custom_call.1} parent=1 // pred_check_branch
      %49 = sbr.rel (0) target = $region53
    $region52: #{tpu_custom_call.1} parent=1 // pred_region
      _
    $region53: #{tpu_custom_call.1} parent=1 // pred_fallthru
      _
    // Predicated region
    $region54: #{tpu_custom_call.1} parent=1 // pred_check
      _
    $region55: #{tpu_custom_call.1} parent=1 // pred_check_branch
      %51 = sbr.rel (0) target = $region57
    $region56: #{tpu_custom_call.1} parent=1 // pred_region
      _
    $region57: #{tpu_custom_call.1} parent=1 // pred_fallthru
      _
    // Predicated region
    $region58: #{tpu_custom_call.1} parent=1 // pred_check
      _
    $region59: #{tpu_custom_call.1} parent=1 // pred_check_branch
      %53 = sbr.rel (0) target = $region61
    $region60: #{tpu_custom_call.1} parent=1 // pred_region
      _
    $region61: #{tpu_custom_call.1} parent=1 // pred_fallthru
      _
    // Predicated region
    $region62: #{tpu_custom_call.1} parent=1 // pred_check
      _
    $region63: #{tpu_custom_call.1} parent=1 // pred_check_branch
      %55 = sbr.rel (0) target = $region65
    $region64: #{tpu_custom_call.1} parent=1 // pred_region
      _
    $region65: #{tpu_custom_call.1} parent=1 // pred_fallthru
      _
    // Predicated region
    $region66: #{tpu_custom_call.1} parent=1 // pred_check
      _
    $region67: #{tpu_custom_call.1} parent=1 // pred_check_branch
      %57 = sbr.rel (0) target = $region69
    $region68: #{tpu_custom_call.1} parent=1 // pred_region
      _
    $region69: #{tpu_custom_call.1} parent=1 // pred_fallthru
      _
    // Predicated region
    $region70: #{tpu_custom_call.1} parent=1 // pred_check
      _
    $region71: #{tpu_custom_call.1} parent=1 // pred_check_branch
      %59 = sbr.rel (0) target = $region73
    $region72: #{tpu_custom_call.1} parent=1 // pred_region
      _
    $region73: #{tpu_custom_call.1} parent=1 // pred_fallthru
      _
    %v63 = vld [vmem:[%s0] sm:$0xf]
    %v64 = vld [vmem:[%s0 + $0x4] sm:$0xf]
    %vm65 = vcmp.gt.bf16.partialorder %v63, 0
    %vm66 = vcmp.gt.bf16.partialorder %v64, 0
    %v67 = vld [vmem:[%s1] sm:$0xff]
    %v68 = vld [vmem:[%s1 + $0x8] sm:$0xff]
    %v69 = vpack.c.bf16 %v68, %v67
    %v70 = vld [vmem:[%s2] sm:$0xf]
    %vm71 = vcmask 64512
    %v73 = vsel %vm71, %v69, 0
    %vm75 = vcmask 1043456
    %v77 = vsel %vm75, %v70, 0
    %79 = vmatprep.subr.bf16.mxu0 0
    %80 = vmatpush1.bf16.msra.mxu0 %v77
    %81 = vmatprep.subr.bf16.mxu0 0
    %82 = vmatpush1.bf16.msra.mxu0 0
    %83 = vmatprep.subr.bf16.mxu0 0
    %84 = vmatpush1.bf16.msra.mxu0 0
    %85 = vmatprep.subr.bf16.mxu0 0
    %86 = vmatpush1.bf16.msra.mxu0 0
    %87 = vmatprep.subr.bf16.mxu0 0
    %88 = vmatpush1.bf16.msra.mxu0 0
    %89 = vmatprep.subr.bf16.mxu0 0
    %90 = vmatpush1.bf16.msra.mxu0 0
    %91 = vmatprep.subr.bf16.mxu0 0
    %92 = vmatpush1.bf16.msra.mxu0 0
    %93 = vmatprep.subr.bf16.mxu0 0
    %94 = vmatpush1.bf16.msra.mxu0 0
    %95 = vmatprep.subr.bf16.mxu0 0
    %96 = vmatpush1.bf16.msra.mxu0 0
    %97 = vmatprep.subr.bf16.mxu0 0
    %98 = vmatpush1.bf16.msra.mxu0 0
    %99 = vmatprep.subr.bf16.mxu0 0
    %100 = vmatpush1.bf16.msra.mxu0 0
    %101 = vmatprep.subr.bf16.mxu0 0
    %102 = vmatpush1.bf16.msra.mxu0 0
    %103 = vmatprep.subr.bf16.mxu0 0
    %104 = vmatpush1.bf16.msra.mxu0 0
    %105 = vmatprep.subr.bf16.mxu0 0
    %106 = vmatpush1.bf16.msra.mxu0 0
    %107 = vmatprep.subr.bf16.mxu0 0
    %108 = vmatpush1.bf16.msra.mxu0 0
    %109 = vmatprep.subr.bf16.mxu0 0
    %110 = vmatpush1.bf16.msra.mxu0 0
    %111 = vmatprep.mubr.bf16.mxu0 0
    %112 = vmatmul.mubr.bf16.gmra.mrb[0].mxu0 %v73
    %v113 = vpop.f32.mrb[0].mxu0
    %v114 = vadd.f32 0.0, %v113
    %v115 = vpop.f32.mrb[0].mxu0
    %v116 = vpop.f32.mrb[0].mxu0
    %v117 = vadd.f32 0.0, %v116
    %v118 = vpop.f32.mrb[0].mxu0
    %119 = vdwg.mxu0
    %v120 = vpack.c.bf16 %v117, %v114
    %v121 = vld [vmem:[%s4] sm:$0x1]
    %v123 = vlaneseq
    %v124 = vshrl.u32 %v123, 7
    %v125 = vsub.s32 0, %v124
    %v126 = vrot.slane %v121, %v125
    %v130 = vunpack.c.l.b16 %v63
    %v131 = vunpack.c.l.b16 %v64
    %v132 = vpack.c.b16 %v131, %v130
    %vm133 = vcmask 130048
    %v135 = vsel %vm133, %v132, 0
    %137 = vmatprep.subr.bf16.mxu0 0
    %138 = vmatpush1.bf16.msra.mxu0 %v120
    %139 = vmatprep.subr.bf16.mxu0 0
    %140 = vmatpush1.bf16.msra.mxu0 0
    %141 = vmatprep.subr.bf16.mxu0 0
    %142 = vmatpush1.bf16.msra.mxu0 0
    %143 = vmatprep.subr.bf16.mxu0 0
    %144 = vmatpush1.bf16.msra.mxu0 0
    %145 = vmatprep.subr.bf16.mxu0 0
    %146 = vmatpush1.bf16.msra.mxu0 0
    %147 = vmatprep.subr.bf16.mxu0 0
    %148 = vmatpush1.bf16.msra.mxu0 0
    %149 = vmatprep.subr.bf16.mxu0 0
    %150 = vmatpush1.bf16.msra.mxu0 0
    %151 = vmatprep.subr.bf16.mxu0 0
    %152 = vmatpush1.bf16.msra.mxu0 0
    %153 = vmatprep.subr.bf16.mxu0 0
    %154 = vmatpush1.bf16.msra.mxu0 0
    %155 = vmatprep.subr.bf16.mxu0 0
    %156 = vmatpush1.bf16.msra.mxu0 0
    %157 = vmatprep.subr.bf16.mxu0 0
    %158 = vmatpush1.bf16.msra.mxu0 0
    %159 = vmatprep.subr.bf16.mxu0 0
    %160 = vmatpush1.bf16.msra.mxu0 0
    %161 = vmatprep.subr.bf16.mxu0 0
    %162 = vmatpush1.bf16.msra.mxu0 0
    %163 = vmatprep.subr.bf16.mxu0 0
    %164 = vmatpush1.bf16.msra.mxu0 0
    %165 = vmatprep.subr.bf16.mxu0 0
    %166 = vmatpush1.bf16.msra.mxu0 0
    %167 = vmatprep.subr.bf16.mxu0 0
    %168 = vmatpush1.bf16.msra.mxu0 0
    %169 = vmatprep.mubr.bf16.mxu0 0
    %170 = vmatmul.mubr.bf16.gmra.mrb[0].mxu0 %v135
    %v171 = vpop.f32.mrb[0].mxu0
    %v172 = vadd.f32 %v126, %v171
    %v173 = vpop.f32.mrb[0].mxu0
    %v174 = vpop.f32.mrb[0].mxu0
    %v175 = vadd.f32 %v126, %v174
    %v176 = vpop.f32.mrb[0].mxu0
    %177 = vdwg.mxu0
    %v178 = vld [vmem:[%s3] sm:$0xf]
    %v179 = vld [vmem:[%s5] sm:$0x1]
    %v181 = vlaneseq
    %v182 = vshrl.u32 %v181, 7
    %v183 = vsub.s32 0, %v182
    %v184 = vrot.slane %v179, %v183
    %v187 = vsel %vm75, %v178, 0
    %189 = vmatprep.subr.bf16.mxu0 0
    %190 = vmatpush1.bf16.msra.mxu0 %v187
    %191 = vmatprep.subr.bf16.mxu0 0
    %192 = vmatpush1.bf16.msra.mxu0 0
    %193 = vmatprep.subr.bf16.mxu0 0
    %194 = vmatpush1.bf16.msra.mxu0 0
    %195 = vmatprep.subr.bf16.mxu0 0
    %196 = vmatpush1.bf16.msra.mxu0 0
    %197 = vmatprep.subr.bf16.mxu0 0
    %198 = vmatpush1.bf16.msra.mxu0 0
    %199 = vmatprep.subr.bf16.mxu0 0
    %200 = vmatpush1.bf16.msra.mxu0 0
    %201 = vmatprep.subr.bf16.mxu0 0
    %202 = vmatpush1.bf16.msra.mxu0 0
    %203 = vmatprep.subr.bf16.mxu0 0
    %204 = vmatpush1.bf16.msra.mxu0 0
    %205 = vmatprep.subr.bf16.mxu0 0
    %206 = vmatpush1.bf16.msra.mxu0 0
    %207 = vmatprep.subr.bf16.mxu0 0
    %208 = vmatpush1.bf16.msra.mxu0 0
    %209 = vmatprep.subr.bf16.mxu0 0
    %210 = vmatpush1.bf16.msra.mxu0 0
    %211 = vmatprep.subr.bf16.mxu0 0
    %212 = vmatpush1.bf16.msra.mxu0 0
    %213 = vmatprep.subr.bf16.mxu0 0
    %214 = vmatpush1.bf16.msra.mxu0 0
    %215 = vmatprep.subr.bf16.mxu0 0
    %216 = vmatpush1.bf16.msra.mxu0 0
    %217 = vmatprep.subr.bf16.mxu0 0
    %218 = vmatpush1.bf16.msra.mxu0 0
    %219 = vmatprep.subr.bf16.mxu0 0
    %220 = vmatpush1.bf16.msra.mxu0 0
    %221 = vmatprep.mubr.bf16.mxu0 0
    %222 = vmatmul.mubr.bf16.gmra.mrb[0].mxu0 %v73
    %v223 = vpop.f32.mrb[0].mxu0
    %v224 = vadd.f32 %v184, %v223
    %v225 = vpop.f32.mrb[0].mxu0
    %v226 = vpop.f32.mrb[0].mxu0
    %v227 = vadd.f32 %v184, %v226
    %v228 = vpop.f32.mrb[0].mxu0
    %229 = vdwg.mxu0
    %vm230 = vcmp.gt.f32.partialorder %v172, 0.0
    %vm231 = vcmp.gt.f32.partialorder %v175, 0.0
    %v232 = vmul.f32 %v172, 0.01
    %v233 = vmul.f32 %v175, 0.01
    %v234 = vsel %vm230, %v172, %v232
    %v235 = vsel %vm231, %v175, %v233
    %v236 = vadd.f32 %v234, %v224
    %v237 = vadd.f32 %v235, %v227
    %v238 = vpack.c.bf16 %v237, %v236
    loop: start=0, step=1, limit=4
    $region74: #{tpu_custom_call.1} parent=1 // loop_pre_header
      _
    $region75: #{tpu_custom_call.1} parent=1 // loop_header
      %s240 = sphi 0, %s244
      %p241 = scmp.ge.s32.totalorder %s240, 4
      %v245 = vphi 0.0, %v491
      %v246 = vphi 0.0, %v492
    $region76: #{tpu_custom_call.1} parent=1 // loop_header_branch
      %243 = sbr.rel (%p241) target = $region80
    $region77: #{tpu_custom_call.1} parent=1 // loop_body
      %s247 = smul.u32 %s240, 4
      %s248 = smul.addr %s247, 4
      %s249 = scalar_lea.vmem %s6, %s248
      %v250 = vld [vmem:[%s249] sm:$0xf]
      %v251 = vld [vmem:[%s249 + $0x4] sm:$0xf]
      %v252 = vld [vmem:[%s249 + $0x8] sm:$0xf]
      %v253 = vld [vmem:[%s249 + $0xc] sm:$0xf]
      %v258 = vunpack.c.l.b16 %v250
      %v259 = vunpack.c.l.b16 %v251
      %v260 = vunpack.c.l.b16 %v252
      %v261 = vunpack.c.l.b16 %v253
      %v262 = vpack.c.b16 %v259, %v258
      %v263 = vpack.c.b16 %v261, %v260
      %vm266 = vcmask 261120
      %v268 = vsel %vm266, %v238, 0
      %270 = vmatprep.subr.bf16.mxu0 0
      %271 = vmatpush1.bf16.msra.mxu0 %v262
      %272 = vmatprep.subr.bf16.mxu0 0
      %273 = vmatpush1.bf16.msra.mxu0 %v263
      %274 = vmatprep.subr.bf16.mxu0 0
      %275 = vmatpush1.bf16.msra.mxu0 0
      %276 = vmatprep.subr.bf16.mxu0 0
      %277 = vmatpush1.bf16.msra.mxu0 0
      %278 = vmatprep.subr.bf16.mxu0 0
      %279 = vmatpush1.bf16.msra.mxu0 0
      %280 = vmatprep.subr.bf16.mxu0 0
      %281 = vmatpush1.bf16.msra.mxu0 0
      %282 = vmatprep.subr.bf16.mxu0 0
      %283 = vmatpush1.bf16.msra.mxu0 0
      %284 = vmatprep.subr.bf16.mxu0 0
      %285 = vmatpush1.bf16.msra.mxu0 0
      %286 = vmatprep.subr.bf16.mxu0 0
      %287 = vmatpush1.bf16.msra.mxu0 0
      %288 = vmatprep.subr.bf16.mxu0 0
      %289 = vmatpush1.bf16.msra.mxu0 0
      %290 = vmatprep.subr.bf16.mxu0 0
      %291 = vmatpush1.bf16.msra.mxu0 0
      %292 = vmatprep.subr.bf16.mxu0 0
      %293 = vmatpush1.bf16.msra.mxu0 0
      %294 = vmatprep.subr.bf16.mxu0 0
      %295 = vmatpush1.bf16.msra.mxu0 0
      %296 = vmatprep.subr.bf16.mxu0 0
      %297 = vmatpush1.bf16.msra.mxu0 0
      %298 = vmatprep.subr.bf16.mxu0 0
      %299 = vmatpush1.bf16.msra.mxu0 0
      %300 = vmatprep.subr.bf16.mxu0 0
      %301 = vmatpush1.bf16.msra.mxu0 0
      %302 = vmatprep.mubr.bf16.mxu0 0
      %303 = vmatmul.mubr.bf16.gmra.mrb[0].mxu0 %v268
      %v304 = vpop.f32.mrb[0].mxu0
      %v305 = vadd.f32 0.0, %v304
      %v306 = vpop.f32.mrb[0].mxu0
      %v307 = vpop.f32.mrb[0].mxu0
      %v308 = vadd.f32 0.0, %v307
      %v309 = vpop.f32.mrb[0].mxu0
      %310 = vdwg.mxu0
      %v311 = vpack.c.bf16 %v308, %v305
      %s312 = smul.addr %s240, 4
      %s313 = scalar_lea.vmem %s7, %s312
      %v314 = vld [vmem:[%s313] sm:$0xf]
      %v316 = vsel %vm71, %v311, 0
      %v319 = vsel %vm75, %v314, 0
      %321 = vmatprep.subr.bf16.mxu0 0
      %322 = vmatpush1.bf16.msra.mxu0 %v319
      %323 = vmatprep.subr.bf16.mxu0 0
      %324 = vmatpush1.bf16.msra.mxu0 0
      %325 = vmatprep.subr.bf16.mxu0 0
      %326 = vmatpush1.bf16.msra.mxu0 0
      %327 = vmatprep.subr.bf16.mxu0 0
      %328 = vmatpush1.bf16.msra.mxu0 0
      %329 = vmatprep.subr.bf16.mxu0 0
      %330 = vmatpush1.bf16.msra.mxu0 0
      %331 = vmatprep.subr.bf16.mxu0 0
      %332 = vmatpush1.bf16.msra.mxu0 0
      %333 = vmatprep.subr.bf16.mxu0 0
      %334 = vmatpush1.bf16.msra.mxu0 0
      %335 = vmatprep.subr.bf16.mxu0 0
      %336 = vmatpush1.bf16.msra.mxu0 0
      %337 = vmatprep.subr.bf16.mxu0 0
      %338 = vmatpush1.bf16.msra.mxu0 0
      %339 = vmatprep.subr.bf16.mxu0 0
      %340 = vmatpush1.bf16.msra.mxu0 0
      %341 = vmatprep.subr.bf16.mxu0 0
      %342 = vmatpush1.bf16.msra.mxu0 0
      %343 = vmatprep.subr.bf16.mxu0 0
      %344 = vmatpush1.bf16.msra.mxu0 0
      %345 = vmatprep.subr.bf16.mxu0 0
      %346 = vmatpush1.bf16.msra.mxu0 0
      %347 = vmatprep.subr.bf16.mxu0 0
      %348 = vmatpush1.bf16.msra.mxu0 0
      %349 = vmatprep.subr.bf16.mxu0 0
      %350 = vmatpush1.bf16.msra.mxu0 0
      %351 = vmatprep.subr.bf16.mxu0 0
      %352 = vmatpush1.bf16.msra.mxu0 0
      %353 = vmatprep.mubr.bf16.mxu0 0
      %354 = vmatmul.mubr.bf16.gmra.mrb[0].mxu0 %v316
      %v355 = vpop.f32.mrb[0].mxu0
      %v356 = vadd.f32 0.0, %v355
      %v357 = vpop.f32.mrb[0].mxu0
      %v358 = vpop.f32.mrb[0].mxu0
      %v359 = vadd.f32 0.0, %v358
      %v360 = vpop.f32.mrb[0].mxu0
      %361 = vdwg.mxu0
      %362 = vxpose.xlu0.b32.start [1/16] %v356, 128
      %363 = vxpose.xlu0.b32.cont [2/16] %v359, 128
      %364 = vxpose.xlu0.b32.cont [3/16] 0.0, 128
      %365 = vxpose.xlu0.b32.cont [4/16] 0.0, 128
      %366 = vxpose.xlu0.b32.cont [5/16] 0.0, 128
      %367 = vxpose.xlu0.b32.cont [6/16] 0.0, 128
      %368 = vxpose.xlu0.b32.cont [7/16] 0.0, 128
      %369 = vxpose.xlu0.b32.cont [8/16] 0.0, 128
      %370 = vxpose.xlu0.b32.cont [9/16] 0.0, 128
      %371 = vxpose.xlu0.b32.cont [10/16] 0.0, 128
      %372 = vxpose.xlu0.b32.cont [11/16] 0.0, 128
      %373 = vxpose.xlu0.b32.cont [12/16] 0.0, 128
      %374 = vxpose.xlu0.b32.cont [13/16] 0.0, 128
      %375 = vxpose.xlu0.b32.cont [14/16] 0.0, 128
      %376 = vxpose.xlu0.b32.cont [15/16] 0.0, 128
      %377 = vxpose.xlu0.b32.end [16/16] 0.0, 128
      %v378 = vpop.trf.xlu0
      %v379 = vpop.trf.xlu0
      %v380 = vpop.trf.xlu0
      %v381 = vpop.trf.xlu0
      %v382 = vpop.trf.xlu0
      %v383 = vpop.trf.xlu0
      %v384 = vpop.trf.xlu0
      %v385 = vpop.trf.xlu0
      %v386 = vpop.trf.xlu0
      %v387 = vpop.trf.xlu0
      %v388 = vpop.trf.xlu0
      %v389 = vpop.trf.xlu0
      %v390 = vpop.trf.xlu0
      %v391 = vpop.trf.xlu0
      %v392 = vpop.trf.xlu0
      %v393 = vpop.trf.xlu0
      %395 = vset.pattern.permute.xlu0 1
      %396 = vperm.xlu0 %395, %v356
      %v397 = vpop.permute.xlu0 %396
      %400 = vset.pattern.permute.xlu0 1
      %401 = vperm.xlu0 %400, %v359
      %v402 = vpop.permute.xlu0 %401
      %v404 = vlaneseq
      %v405 = vshrl.u32 %v404, 7
      %v406 = vsub.s32 0, %v405
      %v407 = vrot.slane %v378, %v406
      %v408 = vadd.f32 %v397, %v407
      %v409 = vadd.f32 %v402, %v407
      %vm410 = vcmp.gt.f32.partialorder %v408, 0.0
      %vm411 = vcmp.gt.f32.partialorder %v409, 0.0
      %v412 = vmul.f32 %v408, 0.2
      %v413 = vmul.f32 %v409, 0.2
      %v414 = vsel %vm410, %v408, %v412
      %v415 = vsel %vm411, %v409, %v413
      %v416 = vsel %vm65, 65537, 0
      %v417 = vsel %vm66, 65537, 0
      %v418 = vunpack.c.l.b16 %v416
      %v419 = vunpack.c.l.b16 %v417
      %vm420 = vcmp.ne.s32.totalorder %v418, 0
      %vm421 = vcmp.ne.s32.totalorder %v419, 0
      %v422 = vsel %vm420, %v414, -1e+30
      %v423 = vsel %vm421, %v415, -1e+30
      %v424 = vsel %vm133, %v422, -inf
      %425 = vmax.xlane.f32.xlu0 %v424
      %v426 = vpop.xlane.xlu0 %425
      %v427 = vsel %vm133, %v423, -inf
      %428 = vmax.xlane.f32.xlu0 %v427
      %v429 = vpop.xlane.xlu0 %428
      %v430 = vsub.f32 %v422, %v426
      %v431 = vsub.f32 %v423, %v429
      %v432 = vmul.f32 %v430, 1.442695
      %v433 = vpow.pop %v432
      %v434 = vmul.f32 %v431, 1.442695
      %v435 = vpow.pop %v434
      %v436 = vsel %vm133, %v433, 0.0
      %437 = vadd.xlane.f32.xlu0 %v436
      %v438 = vpop.xlane.xlu0 %437
      %v439 = vsel %vm133, %v435, 0.0
      %440 = vadd.xlane.f32.xlu0 %v439
      %v441 = vpop.xlane.xlu0 %440
      %v442 = vrcp.pop %v438
      %v443 = vrcp.pop %v441
      %v444 = vmul.f32 %v433, %v442
      %v445 = vmul.f32 %v435, %v443
      %v446 = vpack.c.bf16 %v445, %v444
      %v448 = vsel %vm133, %v446, 0
      %450 = vmatprep.subr.bf16.mxu0 0
      %451 = vmatpush1.bf16.msra.mxu0 %v311
      %452 = vmatprep.subr.bf16.mxu0 0
      %453 = vmatpush1.bf16.msra.mxu0 0
      %454 = vmatprep.subr.bf16.mxu0 0
      %455 = vmatpush1.bf16.msra.mxu0 0
      %456 = vmatprep.subr.bf16.mxu0 0
      %457 = vmatpush1.bf16.msra.mxu0 0
      %458 = vmatprep.subr.bf16.mxu0 0
      %459 = vmatpush1.bf16.msra.mxu0 0
      %460 = vmatprep.subr.bf16.mxu0 0
      %461 = vmatpush1.bf16.msra.mxu0 0
      %462 = vmatprep.subr.bf16.mxu0 0
      %463 = vmatpush1.bf16.msra.mxu0 0
      %464 = vmatprep.subr.bf16.mxu0 0
      %465 = vmatpush1.bf16.msra.mxu0 0
      %466 = vmatprep.subr.bf16.mxu0 0
      %467 = vmatpush1.bf16.msra.mxu0 0
      %468 = vmatprep.subr.bf16.mxu0 0
      %469 = vmatpush1.bf16.msra.mxu0 0
      %470 = vmatprep.subr.bf16.mxu0 0
      %471 = vmatpush1.bf16.msra.mxu0 0
      %472 = vmatprep.subr.bf16.mxu0 0
      %473 = vmatpush1.bf16.msra.mxu0 0
      %474 = vmatprep.subr.bf16.mxu0 0
      %475 = vmatpush1.bf16.msra.mxu0 0
      %476 = vmatprep.subr.bf16.mxu0 0
      %477 = vmatpush1.bf16.msra.mxu0 0
      %478 = vmatprep.subr.bf16.mxu0 0
      %479 = vmatpush1.bf16.msra.mxu0 0
      %480 = vmatprep.subr.bf16.mxu0 0
      %481 = vmatpush1.bf16.msra.mxu0 0
      %482 = vmatprep.mubr.bf16.mxu0 0
      %483 = vmatmul.mubr.bf16.gmra.mrb[0].mxu0 %v448
      %v484 = vpop.f32.mrb[0].mxu0
      %v485 = vadd.f32 0.0, %v484
      %v486 = vpop.f32.mrb[0].mxu0
      %v487 = vpop.f32.mrb[0].mxu0
      %v488 = vadd.f32 0.0, %v487
      %v489 = vpop.f32.mrb[0].mxu0
      %490 = vdwg.mxu0
      %v491 = vadd.f32 %v245, %v485
      %v492 = vadd.f32 %v246, %v488
    $region78: #{tpu_custom_call.1} parent=1 // loop_footer
      %s244 = sadd.s32 1, %s240
    $region79: #{tpu_custom_call.1} parent=1 // loop_footer_branch
      %239 = sbr.rel target = $region75
    $region80: #{tpu_custom_call.1} parent=1 // loop_exit
      _
    %v493 = vld [vmem:[%s10] sm:$0xf]
    %v494 = vld [vmem:[%s10 + $0x4] sm:$0xf]
    %v495 = vld [vmem:[%s10 + $0x8] sm:$0xf]
    %v496 = vld [vmem:[%s10 + $0xc] sm:$0xf]
    %v497 = vld [vmem:[%s11] sm:$0x1]
    %v499 = vlaneseq
    %v500 = vshrl.u32 %v499, 7
    %v501 = vsub.s32 0, %v500
    %v502 = vrot.slane %v497, %v501
    %v508 = vunpack.c.l.b16 %v493
    %v509 = vunpack.c.l.b16 %v494
    %v510 = vunpack.c.l.b16 %v495
    %v511 = vunpack.c.l.b16 %v496
    %v512 = vpack.c.b16 %v509, %v508
    %v513 = vpack.c.b16 %v511, %v510
    %vm516 = vcmask 261120
    %v518 = vsel %vm516, %v238, 0
    %520 = vmatprep.subr.bf16.mxu0 0
    %521 = vmatpush1.bf16.msra.mxu0 %v512
    %522 = vmatprep.subr.bf16.mxu0 0
    %523 = vmatpush1.bf16.msra.mxu0 %v513
    %524 = vmatprep.subr.bf16.mxu0 0
    %525 = vmatpush1.bf16.msra.mxu0 0
    %526 = vmatprep.subr.bf16.mxu0 0
    %527 = vmatpush1.bf16.msra.mxu0 0
    %528 = vmatprep.subr.bf16.mxu0 0
    %529 = vmatpush1.bf16.msra.mxu0 0
    %530 = vmatprep.subr.bf16.mxu0 0
    %531 = vmatpush1.bf16.msra.mxu0 0
    %532 = vmatprep.subr.bf16.mxu0 0
    %533 = vmatpush1.bf16.msra.mxu0 0
    %534 = vmatprep.subr.bf16.mxu0 0
    %535 = vmatpush1.bf16.msra.mxu0 0
    %536 = vmatprep.subr.bf16.mxu0 0
    %537 = vmatpush1.bf16.msra.mxu0 0
    %538 = vmatprep.subr.bf16.mxu0 0
    %539 = vmatpush1.bf16.msra.mxu0 0
    %540 = vmatprep.subr.bf16.mxu0 0
    %541 = vmatpush1.bf16.msra.mxu0 0
    %542 = vmatprep.subr.bf16.mxu0 0
    %543 = vmatpush1.bf16.msra.mxu0 0
    %544 = vmatprep.subr.bf16.mxu0 0
    %545 = vmatpush1.bf16.msra.mxu0 0
    %546 = vmatprep.subr.bf16.mxu0 0
    %547 = vmatpush1.bf16.msra.mxu0 0
    %548 = vmatprep.subr.bf16.mxu0 0
    %549 = vmatpush1.bf16.msra.mxu0 0
    %550 = vmatprep.subr.bf16.mxu0 0
    %551 = vmatpush1.bf16.msra.mxu0 0
    %552 = vmatprep.mubr.bf16.mxu0 0
    %553 = vmatmul.mubr.bf16.gmra.mrb[0].mxu0 %v518
    %v554 = vpop.f32.mrb[0].mxu0
    %v555 = vadd.f32 %v502, %v554
    %v556 = vpop.f32.mrb[0].mxu0
    %v557 = vpop.f32.mrb[0].mxu0
    %v558 = vadd.f32 %v502, %v557
    %v559 = vpop.f32.mrb[0].mxu0
    %560 = vdwg.mxu0
    %v561 = vld [vmem:[%s9] sm:$0x1]
    %v563 = vlaneseq
    %v564 = vshrl.u32 %v563, 7
    %v565 = vsub.s32 0, %v564
    %v566 = vrot.slane %v561, %v565
    %v568 = vmul.f32 %v245, %v566
    %v569 = vmul.f32 %v246, %v566
    %v570 = vld [vmem:[%s8] sm:$0x1]
    %v572 = vlaneseq
    %v573 = vshrl.u32 %v572, 7
    %v574 = vsub.s32 0, %v573
    %v575 = vrot.slane %v570, %v574
    %v577 = vadd.f32 %v568, %v575
    %v578 = vadd.f32 %v569, %v575
    %vm579 = vcmp.gt.f32.partialorder %v577, 0.0
    %vm580 = vcmp.gt.f32.partialorder %v578, 0.0
    %v581 = vmul.f32 %v577, 0.01
    %v582 = vmul.f32 %v578, 0.01
    %v583 = vsel %vm579, %v577, %v581
    %v584 = vsel %vm580, %v578, %v582
    %v585 = vadd.f32 %v583, %v555
    %v586 = vadd.f32 %v584, %v558
    %v587 = vpack.c.bf16 %v586, %v585
    %v588 = vld [vmem:[%s12] sm:$0xf]
    %v590 = vsel %vm71, %v587, 0
    %v593 = vsel %vm75, %v588, 0
    %595 = vmatprep.subr.bf16.mxu0 0
    %596 = vmatpush1.bf16.msra.mxu0 %v593
    %597 = vmatprep.subr.bf16.mxu0 0
    %598 = vmatpush1.bf16.msra.mxu0 0
    %599 = vmatprep.subr.bf16.mxu0 0
    %600 = vmatpush1.bf16.msra.mxu0 0
    %601 = vmatprep.subr.bf16.mxu0 0
    %602 = vmatpush1.bf16.msra.mxu0 0
    %603 = vmatprep.subr.bf16.mxu0 0
    %604 = vmatpush1.bf16.msra.mxu0 0
    %605 = vmatprep.subr.bf16.mxu0 0
    %606 = vmatpush1.bf16.msra.mxu0 0
    %607 = vmatprep.subr.bf16.mxu0 0
    %608 = vmatpush1.bf16.msra.mxu0 0
    %609 = vmatprep.subr.bf16.mxu0 0
    %610 = vmatpush1.bf16.msra.mxu0 0
    %611 = vmatprep.subr.bf16.mxu0 0
    %612 = vmatpush1.bf16.msra.mxu0 0
    %613 = vmatprep.subr.bf16.mxu0 0
    %614 = vmatpush1.bf16.msra.mxu0 0
    %615 = vmatprep.subr.bf16.mxu0 0
    %616 = vmatpush1.bf16.msra.mxu0 0
    %617 = vmatprep.subr.bf16.mxu0 0
    %618 = vmatpush1.bf16.msra.mxu0 0
    %619 = vmatprep.subr.bf16.mxu0 0
    %620 = vmatpush1.bf16.msra.mxu0 0
    %621 = vmatprep.subr.bf16.mxu0 0
    %622 = vmatpush1.bf16.msra.mxu0 0
    %623 = vmatprep.subr.bf16.mxu0 0
    %624 = vmatpush1.bf16.msra.mxu0 0
    %625 = vmatprep.subr.bf16.mxu0 0
    %626 = vmatpush1.bf16.msra.mxu0 0
    %627 = vmatprep.mubr.bf16.mxu0 0
    %628 = vmatmul.mubr.bf16.gmra.mrb[0].mxu0 %v590
    %v629 = vpop.f32.mrb[0].mxu0
    %v630 = vadd.f32 0.0, %v629
    %v631 = vpop.f32.mrb[0].mxu0
    %v632 = vpop.f32.mrb[0].mxu0
    %v633 = vadd.f32 0.0, %v632
    %v634 = vpop.f32.mrb[0].mxu0
    %635 = vdwg.mxu0
    %v636 = vpack.c.bf16 %v633, %v630
    %v637 = vld [vmem:[%s14] sm:$0x1]
    %v639 = vlaneseq
    %v640 = vshrl.u32 %v639, 7
    %v641 = vsub.s32 0, %v640
    %v642 = vrot.slane %v637, %v641
    %644 = vmatprep.subr.bf16.mxu0 0
    %645 = vmatpush1.bf16.msra.mxu0 %v636
    %646 = vmatprep.subr.bf16.mxu0 0
    %647 = vmatpush1.bf16.msra.mxu0 0
    %648 = vmatprep.subr.bf16.mxu0 0
    %649 = vmatpush1.bf16.msra.mxu0 0
    %650 = vmatprep.subr.bf16.mxu0 0
    %651 = vmatpush1.bf16.msra.mxu0 0
    %652 = vmatprep.subr.bf16.mxu0 0
    %653 = vmatpush1.bf16.msra.mxu0 0
    %654 = vmatprep.subr.bf16.mxu0 0
    %655 = vmatpush1.bf16.msra.mxu0 0
    %656 = vmatprep.subr.bf16.mxu0 0
    %657 = vmatpush1.bf16.msra.mxu0 0
    %658 = vmatprep.subr.bf16.mxu0 0
    %659 = vmatpush1.bf16.msra.mxu0 0
    %660 = vmatprep.subr.bf16.mxu0 0
    %661 = vmatpush1.bf16.msra.mxu0 0
    %662 = vmatprep.subr.bf16.mxu0 0
    %663 = vmatpush1.bf16.msra.mxu0 0
    %664 = vmatprep.subr.bf16.mxu0 0
    %665 = vmatpush1.bf16.msra.mxu0 0
    %666 = vmatprep.subr.bf16.mxu0 0
    %667 = vmatpush1.bf16.msra.mxu0 0
    %668 = vmatprep.subr.bf16.mxu0 0
    %669 = vmatpush1.bf16.msra.mxu0 0
    %670 = vmatprep.subr.bf16.mxu0 0
    %671 = vmatpush1.bf16.msra.mxu0 0
    %672 = vmatprep.subr.bf16.mxu0 0
    %673 = vmatpush1.bf16.msra.mxu0 0
    %674 = vmatprep.subr.bf16.mxu0 0
    %675 = vmatpush1.bf16.msra.mxu0 0
    %676 = vmatprep.mubr.bf16.mxu0 0
    %677 = vmatmul.mubr.bf16.gmra.mrb[0].mxu0 %v135
    %v678 = vpop.f32.mrb[0].mxu0
    %v679 = vadd.f32 %v642, %v678
    %v680 = vpop.f32.mrb[0].mxu0
    %v681 = vpop.f32.mrb[0].mxu0
    %v682 = vadd.f32 %v642, %v681
    %v683 = vpop.f32.mrb[0].mxu0
    %684 = vdwg.mxu0
    %v685 = vld [vmem:[%s13] sm:$0xf]
    %v686 = vld [vmem:[%s15] sm:$0x1]
    %v688 = vlaneseq
    %v689 = vshrl.u32 %v688, 7
    %v690 = vsub.s32 0, %v689
    %v691 = vrot.slane %v686, %v690
    %v694 = vsel %vm75, %v685, 0
    %696 = vmatprep.subr.bf16.mxu0 0
    %697 = vmatpush1.bf16.msra.mxu0 %v694
    %698 = vmatprep.subr.bf16.mxu0 0
    %699 = vmatpush1.bf16.msra.mxu0 0
    %700 = vmatprep.subr.bf16.mxu0 0
    %701 = vmatpush1.bf16.msra.mxu0 0
    %702 = vmatprep.subr.bf16.mxu0 0
    %703 = vmatpush1.bf16.msra.mxu0 0
    %704 = vmatprep.subr.bf16.mxu0 0
    %705 = vmatpush1.bf16.msra.mxu0 0
    %706 = vmatprep.subr.bf16.mxu0 0
    %707 = vmatpush1.bf16.msra.mxu0 0
    %708 = vmatprep.subr.bf16.mxu0 0
    %709 = vmatpush1.bf16.msra.mxu0 0
    %710 = vmatprep.subr.bf16.mxu0 0
    %711 = vmatpush1.bf16.msra.mxu0 0
    %712 = vmatprep.subr.bf16.mxu0 0
    %713 = vmatpush1.bf16.msra.mxu0 0
    %714 = vmatprep.subr.bf16.mxu0 0
    %715 = vmatpush1.bf16.msra.mxu0 0
    %716 = vmatprep.subr.bf16.mxu0 0
    %717 = vmatpush1.bf16.msra.mxu0 0
    %718 = vmatprep.subr.bf16.mxu0 0
    %719 = vmatpush1.bf16.msra.mxu0 0
    %720 = vmatprep.subr.bf16.mxu0 0
    %721 = vmatpush1.bf16.msra.mxu0 0
    %722 = vmatprep.subr.bf16.mxu0 0
    %723 = vmatpush1.bf16.msra.mxu0 0
    %724 = vmatprep.subr.bf16.mxu0 0
    %725 = vmatpush1.bf16.msra.mxu0 0
    %726 = vmatprep.subr.bf16.mxu0 0
    %727 = vmatpush1.bf16.msra.mxu0 0
    %728 = vmatprep.mubr.bf16.mxu0 0
    %729 = vmatmul.mubr.bf16.gmra.mrb[0].mxu0 %v590
    %v730 = vpop.f32.mrb[0].mxu0
    %v731 = vadd.f32 %v691, %v730
    %v732 = vpop.f32.mrb[0].mxu0
    %v733 = vpop.f32.mrb[0].mxu0
    %v734 = vadd.f32 %v691, %v733
    %v735 = vpop.f32.mrb[0].mxu0
    %736 = vdwg.mxu0
    %vm737 = vcmp.gt.f32.partialorder %v679, 0.0
    %vm738 = vcmp.gt.f32.partialorder %v682, 0.0
    %v739 = vmul.f32 %v679, 0.01
    %v740 = vmul.f32 %v682, 0.01
    %v741 = vsel %vm737, %v679, %v739
    %v742 = vsel %vm738, %v682, %v740
    %v743 = vadd.f32 %v741, %v731
    %v744 = vadd.f32 %v742, %v734
    %v745 = vpack.c.bf16 %v744, %v743
    %v746 = vld [vmem:[%s16] sm:$0x1]
    %vm747 = vcmask 15360
    %v749 = vsel %vm747, %v745, 0
    %vm751 = vcmask 1040384
    %v753 = vsel %vm751, %v746, 0
    %755 = vmatprep.subr.bf16.mxu0 0
    %756 = vmatpush1.bf16.msra.mxu0 %v753
    %757 = vmatprep.subr.bf16.mxu0 0
    %758 = vmatpush1.bf16.msra.mxu0 0
    %759 = vmatprep.subr.bf16.mxu0 0
    %760 = vmatpush1.bf16.msra.mxu0 0
    %761 = vmatprep.subr.bf16.mxu0 0
    %762 = vmatpush1.bf16.msra.mxu0 0
    %763 = vmatprep.subr.bf16.mxu0 0
    %764 = vmatpush1.bf16.msra.mxu0 0
    %765 = vmatprep.subr.bf16.mxu0 0
    %766 = vmatpush1.bf16.msra.mxu0 0
    %767 = vmatprep.subr.bf16.mxu0 0
    %768 = vmatpush1.bf16.msra.mxu0 0
    %769 = vmatprep.subr.bf16.mxu0 0
    %770 = vmatpush1.bf16.msra.mxu0 0
    %771 = vmatprep.subr.bf16.mxu0 0
    %772 = vmatpush1.bf16.msra.mxu0 0
    %773 = vmatprep.subr.bf16.mxu0 0
    %774 = vmatpush1.bf16.msra.mxu0 0
    %775 = vmatprep.subr.bf16.mxu0 0
    %776 = vmatpush1.bf16.msra.mxu0 0
    %777 = vmatprep.subr.bf16.mxu0 0
    %778 = vmatpush1.bf16.msra.mxu0 0
    %779 = vmatprep.subr.bf16.mxu0 0
    %780 = vmatpush1.bf16.msra.mxu0 0
    %781 = vmatprep.subr.bf16.mxu0 0
    %782 = vmatpush1.bf16.msra.mxu0 0
    %783 = vmatprep.subr.bf16.mxu0 0
    %784 = vmatpush1.bf16.msra.mxu0 0
    %785 = vmatprep.subr.bf16.mxu0 0
    %786 = vmatpush1.bf16.msra.mxu0 0
    %787 = vmatprep.mubr.bf16.mxu0 0
    %788 = vmatmul.mubr.bf16.gmra.mrb[0].mxu0 %v749
    %v789 = vpop.f32.mrb[0].mxu0
    %v790 = vadd.f32 0.0, %v789
    %v791 = vpop.f32.mrb[0].mxu0
    %v792 = vpop.f32.mrb[0].mxu0
    %v793 = vadd.f32 0.0, %v792
    %v794 = vpop.f32.mrb[0].mxu0
    %795 = vdwg.mxu0
    %v796 = vpack.c.bf16 %v793, %v790
    %v797 = vld [vmem:[%s17] sm:$0x1]
    %v799 = vlaneseq
    %v800 = vshrl.u32 %v799, 7
    %v801 = vsub.s32 0, %v800
    %v802 = vrot.slane %v797, %v801
    %804 = vmatprep.subr.bf16.mxu0 0
    %805 = vmatpush1.bf16.msra.mxu0 %v796
    %806 = vmatprep.subr.bf16.mxu0 0
    %807 = vmatpush1.bf16.msra.mxu0 0
    %808 = vmatprep.subr.bf16.mxu0 0
    %809 = vmatpush1.bf16.msra.mxu0 0
    %810 = vmatprep.subr.bf16.mxu0 0
    %811 = vmatpush1.bf16.msra.mxu0 0
    %812 = vmatprep.subr.bf16.mxu0 0
    %813 = vmatpush1.bf16.msra.mxu0 0
    %814 = vmatprep.subr.bf16.mxu0 0
    %815 = vmatpush1.bf16.msra.mxu0 0
    %816 = vmatprep.subr.bf16.mxu0 0
    %817 = vmatpush1.bf16.msra.mxu0 0
    %818 = vmatprep.subr.bf16.mxu0 0
    %819 = vmatpush1.bf16.msra.mxu0 0
    %820 = vmatprep.subr.bf16.mxu0 0
    %821 = vmatpush1.bf16.msra.mxu0 0
    %822 = vmatprep.subr.bf16.mxu0 0
    %823 = vmatpush1.bf16.msra.mxu0 0
    %824 = vmatprep.subr.bf16.mxu0 0
    %825 = vmatpush1.bf16.msra.mxu0 0
    %826 = vmatprep.subr.bf16.mxu0 0
    %827 = vmatpush1.bf16.msra.mxu0 0
    %828 = vmatprep.subr.bf16.mxu0 0
    %829 = vmatpush1.bf16.msra.mxu0 0
    %830 = vmatprep.subr.bf16.mxu0 0
    %831 = vmatpush1.bf16.msra.mxu0 0
    %832 = vmatprep.subr.bf16.mxu0 0
    %833 = vmatpush1.bf16.msra.mxu0 0
    %834 = vmatprep.subr.bf16.mxu0 0
    %835 = vmatpush1.bf16.msra.mxu0 0
    %836 = vmatprep.mubr.bf16.mxu0 0
    %837 = vmatmul.mubr.bf16.gmra.mrb[0].mxu0 %v135
    %v838 = vpop.f32.mrb[0].mxu0
    %v839 = vadd.f32 %v802, %v838
    %v840 = vpop.f32.mrb[0].mxu0
    %v841 = vpop.f32.mrb[0].mxu0
    %v842 = vadd.f32 %v802, %v841
    %v843 = vpop.f32.mrb[0].mxu0
    %844 = vdwg.mxu0
    %845 = vst [vmem:[#allocation2] sm:$0xff] %v839
    %846 = vst [vmem:[#allocation2 + $0x8] sm:$0xff] %v842
    // Predicated region
    $region81: #{tpu_custom_call.1} parent=1 // pred_check
      _
    $region82: #{tpu_custom_call.1} parent=1 // pred_check_branch
      %848 = sbr.rel (0) target = $region84
    $region83: #{tpu_custom_call.1} parent=1 // pred_region
      %s850 = ssub.s32 256, 256
      %851 = vsyncadd [#allocation3], %s850
      %s852 = sshll.u32 [#allocation2], 4
      %s853 = int_to_ptr.vmem [resolvable:$true] %s852
      %858 = dma.vmem_to_hbm [thread:$0]  %s853, 256, %s18, [#allocation3], 128, 128, 8
    $region84: #{tpu_custom_call.1} parent=1 // pred_fallthru
      _
    // Predicated region
    $region85: #{tpu_custom_call.1} parent=1 // pred_check
      _
    $region86: #{tpu_custom_call.1} parent=1 // pred_check_branch
      %860 = sbr.rel (0) target = $region88
    $region87: #{tpu_custom_call.1} parent=1 // pred_region
      %861 = dma.done [#allocation3], 256
    $region88: #{tpu_custom_call.1} parent=1 // pred_fallthru
      _
    %862 = vsyncpa [#allocation3], 1

</llo_original>
